<compile_context>
chip_gen: v7x
topology: tpu7x:2x2x1
jax: 0.10.0
libtpu: 0.0.40
codegen_flags: <defaults>
</compile_context>

<pallas_src>
import math

import jax
import jax.numpy as jnp
from jax.experimental import pallas as pl
from jax.experimental.pallas import tpu as pltpu

usernum = 2
N_ACTIONS = int(math.pow(9, usernum))   # 81
xcell = 5
ycell = 5
regionnum = xcell * ycell
N_STATES = regionnum + 1                # 26
HIDDEN = 50

# Batch tile: multiple of 8 (sublane-dense) and of 256 (keeps the 256-wide MXU
# fuller on v6e/v7x); tiny in VMEM (~0.9 MiB double-buffered in/out at f32).
_TB_MAX = 1024


def _net_kernel(x_ref, w1_ref, b1_ref, w2_ref, b2_ref, out_ref):
    """One batch tile: out = relu(x @ w1 + b1) @ w2 + b2.

    Matmuls accumulate in f32 on the MXU; bias add / ReLU / store stay f32.
    """
    x = x_ref[...]
    if x.dtype != w1_ref.dtype:                     # static at trace time
        x = x.astype(w1_ref.dtype)
    h = jnp.dot(x, w1_ref[...], preferred_element_type=jnp.float32)
    h = h + b1_ref[...]                             # biases are f32
    h = jnp.maximum(h, 0.0)
    o = jnp.dot(h.astype(w2_ref.dtype), w2_ref[...],
                preferred_element_type=jnp.float32)
    o = o + b2_ref[...]
    out_ref[...] = o.astype(out_ref.dtype)


def prepare_params(w1, b1, w2, b2, param_dtype=jnp.float32):
    """One-time re-layout of PyTorch Linear parameters.

    w1: (HIDDEN, N_STATES), b1: (HIDDEN,), w2: (N_ACTIONS, HIDDEN),
    b2: (N_ACTIONS,). Returns weights in (in_features, out_features) layout
    (optionally bf16) and biases as f32 (1, out_features) rows, so the
    per-call forward pass emits no transpose / reshape ops.
    """
    w1t = jnp.asarray(w1.T, dtype=param_dtype)          # (N_STATES, HIDDEN)
    w2t = jnp.asarray(w2.T, dtype=param_dtype)          # (HIDDEN, N_ACTIONS)
    b1r = jnp.asarray(b1, jnp.float32).reshape(1, HIDDEN)
    b2r = jnp.asarray(b2, jnp.float32).reshape(1, N_ACTIONS)
    return w1t, b1r, w2t, b2r


def _batch_tile(batch):
    # Whole batch as a single block when it fits (block dim == full array dim
    # is always legal, even if not a multiple of 8); otherwise tile with
    # _TB_MAX and let Pallas handle a partial last block.
    return batch if batch <= _TB_MAX else _TB_MAX


def net_forward(x, params):
    """x: (B, N_STATES); params from prepare_params(). Returns (B, N_ACTIONS) f32."""
    w1t, b1r, w2t, b2r = params
    B = x.shape[0]
    if x.dtype != w1t.dtype:
        # Casting x in the wrapper halves x HBM traffic when params are bf16.
        x = x.astype(w1t.dtype)

    tb = _batch_tile(B)
    grid = (pl.cdiv(B, tb),)

    x_bytes = B * N_STATES * jnp.dtype(x.dtype).itemsize
    w_bytes = (w1t.size * jnp.dtype(w1t.dtype).itemsize
               + w2t.size * jnp.dtype(w2t.dtype).itemsize
               + (b1r.size + b2r.size) * 4)
    out_bytes = B * N_ACTIONS * 4
    cost = pl.CostEstimate(
        flops=2 * B * (N_STATES * HIDDEN + HIDDEN * N_ACTIONS),
        transcendentals=0,
        bytes_accessed=x_bytes + w_bytes + out_bytes,
    )

    return pl.pallas_call(
        _net_kernel,
        out_shape=jax.ShapeDtypeStruct((B, N_ACTIONS), jnp.float32),
        grid=grid,
        in_specs=[
            pl.BlockSpec((tb, N_STATES), lambda i: (i, 0)),      # batch-tiled
            pl.BlockSpec((N_STATES, HIDDEN), lambda i: (0, 0)),  # grid-invariant
            pl.BlockSpec((1, HIDDEN), lambda i: (0, 0)),
            pl.BlockSpec((HIDDEN, N_ACTIONS), lambda i: (0, 0)),
            pl.BlockSpec((1, N_ACTIONS), lambda i: (0, 0)),
        ],
        out_specs=pl.BlockSpec((tb, N_ACTIONS), lambda i: (i, 0)),
        compiler_params=pltpu.CompilerParams(
            dimension_semantics=("parallel",)),   # megacore sharding on v7x
        cost_estimate=cost,
    )(x, w1t, b1r, w2t, b2r)


def _reference(x, w1, b1, w2, b2):
    h = jnp.maximum(x @ w1.T + b1, 0.0)
    return h @ w2.T + b2


if __name__ == "__main__":
    key = jax.random.PRNGKey(0)
    k_x, k_w1, k_b1, k_w2, k_b2 = jax.random.split(key, 5)

    B = 2
    x = jax.random.normal(k_x, (B, N_STATES), dtype=jnp.float32)

    # Deterministic init mirroring Net.__init__:
    #   weights ~ N(0, 0.1); biases approximate PyTorch's default
    #   uniform(-1/sqrt(fan_in), 1/sqrt(fan_in)) init.
    w1 = 0.1 * jax.random.normal(k_w1, (HIDDEN, N_STATES), dtype=jnp.float32)
    b1 = jax.random.uniform(
        k_b1, (HIDDEN,), dtype=jnp.float32,
        minval=-1.0 / math.sqrt(N_STATES), maxval=1.0 / math.sqrt(N_STATES))
    w2 = 0.1 * jax.random.normal(k_w2, (N_ACTIONS, HIDDEN), dtype=jnp.float32)
    b2 = jax.random.uniform(
        k_b2, (N_ACTIONS,), dtype=jnp.float32,
        minval=-1.0 / math.sqrt(HIDDEN), maxval=1.0 / math.sqrt(HIDDEN))

    ref = _reference(x, w1, b1, w2, b2)
    fwd = jax.jit(net_forward)

    # f32 path (bit-accurate to the reference within 1e-4)
    params_f32 = prepare_params(w1, b1, w2, b2, jnp.float32)
    out = jax.block_until_ready(fwd(x, params_f32))
    assert out.shape == (B, N_ACTIONS)
    assert jnp.allclose(out, ref, atol=1e-4, rtol=1e-4)

    # bf16-weight/activation path (memory-bound optimization; looser tolerance)
    params_bf16 = prepare_params(w1, b1, w2, b2, jnp.bfloat16)
    out_bf16 = jax.block_until_ready(fwd(x, params_bf16))
    assert out_bf16.shape == (B, N_ACTIONS)
    assert jnp.allclose(out_bf16, ref, atol=3e-2, rtol=3e-2)

    print("KERNEL_OK")
</pallas_src>

<mosaic_0001>
module attributes {stable_mosaic.version = 11 : i64} {
  func.func @_net_kernel(%arg0: i32, %arg1: memref<2x26xf32, #tpu.memory_space<vmem>>, %arg2: memref<26x50xf32, #tpu.memory_space<vmem>>, %arg3: memref<1x50xf32, #tpu.memory_space<vmem>>, %arg4: memref<50x81xf32, #tpu.memory_space<vmem>>, %arg5: memref<1x81xf32, #tpu.memory_space<vmem>>, %arg6: memref<2x81xf32, #tpu.memory_space<vmem>>) attributes {dimension_semantics = [#tpu.dimension_semantics<parallel>], iteration_bounds = array<i64: 1>, scalar_prefetch = 0 : i64, scratch_operands = 0 : i64, tpu.core_type = #tpu.core_type<tc>, window_params = [{transform_indices = @transform_0, window_bounds = array<i64: 2, 26>}, {pipeline_mode = #tpu.pipeline_mode<synchronous>, transform_indices = @transform_1, window_bounds = array<i64: 26, 50>}, {pipeline_mode = #tpu.pipeline_mode<synchronous>, transform_indices = @transform_2, window_bounds = array<i64: 1, 50>}, {pipeline_mode = #tpu.pipeline_mode<synchronous>, transform_indices = @transform_3, window_bounds = array<i64: 50, 81>}, {pipeline_mode = #tpu.pipeline_mode<synchronous>, transform_indices = @transform_4, window_bounds = array<i64: 1, 81>}, {transform_indices = @transform_5, window_bounds = array<i64: 2, 81>}]} {
    %c0 = arith.constant 0 : index
    %c0_0 = arith.constant 0 : index
    %0 = vector.load %arg1[%c0, %c0_0] : memref<2x26xf32, #tpu.memory_space<vmem>>, vector<2x26xf32>
    %c0_1 = arith.constant 0 : index
    %c0_2 = arith.constant 0 : index
    %1 = vector.load %arg2[%c0_1, %c0_2] : memref<26x50xf32, #tpu.memory_space<vmem>>, vector<26x50xf32>
    %cst = arith.constant dense<0.000000e+00> : vector<2x50xf32>
    %2 = tpu.matmul %0, %1, %cst {dimension_numbers = #tpu.dot_dimension_numbers<[1], [0], [0], [1], [0, 0, 1, 1], [], []>} : vector<2x26xf32>, vector<26x50xf32>, vector<2x50xf32> -> vector<2x50xf32>
    %c0_3 = arith.constant 0 : index
    %c0_4 = arith.constant 0 : index
    %3 = vector.load %arg3[%c0_3, %c0_4] : memref<1x50xf32, #tpu.memory_space<vmem>>, vector<1x50xf32>
    %4 = vector.broadcast %3 : vector<1x50xf32> to vector<2x50xf32>
    %5 = arith.addf %2, %4 : vector<2x50xf32>
    %cst_5 = arith.constant 0.000000e+00 : f32
    %6 = vector.broadcast %cst_5 : f32 to vector<2x50xf32>
    %7 = arith.maximumf %5, %6 : vector<2x50xf32>
    %c0_6 = arith.constant 0 : index
    %c0_7 = arith.constant 0 : index
    %8 = vector.load %arg4[%c0_6, %c0_7] : memref<50x81xf32, #tpu.memory_space<vmem>>, vector<50x81xf32>
    %cst_8 = arith.constant dense<0.000000e+00> : vector<2x81xf32>
    %9 = tpu.matmul %7, %8, %cst_8 {dimension_numbers = #tpu.dot_dimension_numbers<[1], [0], [0], [1], [0, 0, 1, 1], [], []>} : vector<2x50xf32>, vector<50x81xf32>, vector<2x81xf32> -> vector<2x81xf32>
    %c0_9 = arith.constant 0 : index
    %c0_10 = arith.constant 0 : index
    %10 = vector.load %arg5[%c0_9, %c0_10] : memref<1x81xf32, #tpu.memory_space<vmem>>, vector<1x81xf32>
    %11 = vector.broadcast %10 : vector<1x81xf32> to vector<2x81xf32>
    %12 = arith.addf %9, %11 : vector<2x81xf32>
    %c0_11 = arith.constant 0 : index
    %c0_12 = arith.constant 0 : index
    %13 = vector.load %arg6[%c0_11, %c0_12] : memref<2x81xf32, #tpu.memory_space<vmem>>, vector<2x81xf32>
    tpu.vector_store %arg6[%c0_11, %c0_12], %12 {strides = array<i32>} : memref<2x81xf32, #tpu.memory_space<vmem>>, vector<2x81xf32>,
    return
  }
  func.func @transform_0(%arg0: i32) -> (i32, i32) {
    %c0_i32 = arith.constant 0 : i32
    %c0_i32_0 = arith.constant 0 : i32
    return %arg0, %c0_i32 : i32, i32
  }
  func.func @transform_1(%arg0: i32) -> (i32, i32) {
    %c0_i32 = arith.constant 0 : i32
    %c0_i32_0 = arith.constant 0 : i32
    %c0_i32_1 = arith.constant 0 : i32
    return %c0_i32, %c0_i32_0 : i32, i32
  }
  func.func @transform_2(%arg0: i32) -> (i32, i32) {
    %c0_i32 = arith.constant 0 : i32
    %c0_i32_0 = arith.constant 0 : i32
    %c0_i32_1 = arith.constant 0 : i32
    return %c0_i32, %c0_i32_0 : i32, i32
  }
  func.func @transform_3(%arg0: i32) -> (i32, i32) {
    %c0_i32 = arith.constant 0 : i32
    %c0_i32_0 = arith.constant 0 : i32
    %c0_i32_1 = arith.constant 0 : i32
    return %c0_i32, %c0_i32_0 : i32, i32
  }
  func.func @transform_4(%arg0: i32) -> (i32, i32) {
    %c0_i32 = arith.constant 0 : i32
    %c0_i32_0 = arith.constant 0 : i32
    %c0_i32_1 = arith.constant 0 : i32
    return %c0_i32, %c0_i32_0 : i32, i32
  }
  func.func @transform_5(%arg0: i32) -> (i32, i32) {
    %c0_i32 = arith.constant 0 : i32
    %c0_i32_0 = arith.constant 0 : i32
    return %arg0, %c0_i32 : i32, i32
  }
}

</mosaic_0001>

<llo_original>
// kernel: net_forward.1
$region0: #{net_forward.1}
  #allocation0 [shape = 'u32[]', space=smem, size = 0x4, offset = 0x4, fixed_abs, tag = 'smem constant byte address 0x4 - core index']
  #allocation1 [shape = 'u32[144,128]{1,0:T(1,128)}', space=vmem, size = 0x12000, scoped, tag = 'internal scratch']
  %s0 = inlined_call_operand.hbm [shape: f32[2,26], index: 0, kind: input, shape index: {}]
  %s1 = inlined_call_operand.hbm [shape: f32[26,50], index: 1, kind: input, shape index: {}]
  %s2 = inlined_call_operand.vmem [shape: f32[1,50], index: 2, kind: input, shape index: {}]
  %s3 = inlined_call_operand.hbm [shape: f32[50,81], index: 3, kind: input, shape index: {}]
  %s4 = inlined_call_operand.vmem [shape: f32[1,81], index: 4, kind: input, shape index: {}]
  %s5 = inlined_call_operand.hbm [shape: f32[2,81], index: 5, kind: output, shape index: {}]
  %s6 = sld [smem:[#allocation0]]
  $region42: #{net_forward.1} parent=0
    _
  %s8 = ssub.s32 1, %s6
  %s9 = scalar_select 0, %s8, %s6
  $region1: #{net_forward.1} parent=0
    #allocation2 [shape = 'u8[1024]{0}', space=vmem, size = 0x400, scoped, tag = 'input window, operand 0, single buffered']
    #allocation3 [shape = 's32[1]{0}', space=sflag, size = 0x4, scoped, tag = 'scoped memory for net_forward.1']
    #allocation4 [shape = 's32[1]{0}', space=sflag, size = 0x4, scoped, tag = 'scoped memory for net_forward.1']
    #allocation5 [shape = 'u8[16384]{0}', space=vmem, size = 0x4000, scoped, tag = 'input window, operand 1, single buffered']
    #allocation6 [shape = 's32[1]{0}', space=sflag, size = 0x4, scoped, tag = 'scoped memory for net_forward.1']
    #allocation7 [shape = 'u8[28672]{0}', space=vmem, size = 0x7000, scoped, tag = 'input window, operand 3, single buffered']
    #allocation8 [shape = 'u8[1024]{0}', space=vmem, size = 0x400, scoped, tag = 'output window, operand 0, single buffered']
    %10 = vsyncpa [#allocation3], 0
    %11 = vsyncpa [#allocation6], 0
    %12 = vsyncpa [#allocation4], 0
    // Predicated region
    $region2: #{net_forward.1} parent=1 // pred_check
      _
    $region3: #{net_forward.1} parent=1 // pred_check_branch
      %14 = sbr.rel (0) target = $region5
    $region4: #{net_forward.1} parent=1 // pred_region
      %s16 = ssub.s32 32, 32
      %17 = vsyncadd [#allocation3], %s16
      %s19 = sshll.u32 [#allocation2], 4
      %s20 = int_to_ptr.vmem [resolvable:$true] %s19
      %22 = dma.hbm_to_vmem [thread:$0]  %s0, 32, %s20, [#allocation3]
    $region5: #{net_forward.1} parent=1 // pred_fallthru
      _
    // Predicated region
    $region6: #{net_forward.1} parent=1 // pred_check
      _
    $region7: #{net_forward.1} parent=1 // pred_check_branch
      %24 = sbr.rel (0) target = $region9
    $region8: #{net_forward.1} parent=1 // pred_region
      %s26 = ssub.s32 512, 512
      %27 = vsyncadd [#allocation6], %s26
      %s28 = sshll.u32 [#allocation5], 4
      %s29 = int_to_ptr.vmem [resolvable:$true] %s28
      %34 = dma.hbm_to_vmem [thread:$0]  %s1, 512, %s29, [#allocation6], 128, 128, 8
    $region9: #{net_forward.1} parent=1 // pred_fallthru
      _
    // Predicated region
    $region10: #{net_forward.1} parent=1 // pred_check
      _
    $region11: #{net_forward.1} parent=1 // pred_check_branch
      %36 = sbr.rel (0) target = $region13
    $region12: #{net_forward.1} parent=1 // pred_region
      _
    $region13: #{net_forward.1} parent=1 // pred_fallthru
      _
    // Predicated region
    $region14: #{net_forward.1} parent=1 // pred_check
      _
    $region15: #{net_forward.1} parent=1 // pred_check_branch
      %38 = sbr.rel (0) target = $region17
    $region16: #{net_forward.1} parent=1 // pred_region
      %s40 = ssub.s32 896, 896
      %41 = vsyncadd [#allocation6], %s40
      %s42 = sshll.u32 [#allocation7], 4
      %s43 = int_to_ptr.vmem [resolvable:$true] %s42
      %48 = dma.hbm_to_vmem [thread:$0]  %s3, 896, %s43, [#allocation6], 128, 128, 8
    $region17: #{net_forward.1} parent=1 // pred_fallthru
      _
    // Predicated region
    $region18: #{net_forward.1} parent=1 // pred_check
      _
    $region19: #{net_forward.1} parent=1 // pred_check_branch
      %50 = sbr.rel (0) target = $region21
    $region20: #{net_forward.1} parent=1 // pred_region
      _
    $region21: #{net_forward.1} parent=1 // pred_fallthru
      _
    // Predicated region
    $region22: #{net_forward.1} parent=1 // pred_check
      _
    $region23: #{net_forward.1} parent=1 // pred_check_branch
      %52 = sbr.rel (0) target = $region25
    $region24: #{net_forward.1} parent=1 // pred_region
      %53 = dma.done [#allocation3], 32
    $region25: #{net_forward.1} parent=1 // pred_fallthru
      _
    // Predicated region
    $region26: #{net_forward.1} parent=1 // pred_check
      _
    $region27: #{net_forward.1} parent=1 // pred_check_branch
      %55 = sbr.rel (0) target = $region29
    $region28: #{net_forward.1} parent=1 // pred_region
      %56 = dma.done [#allocation6], 512
    $region29: #{net_forward.1} parent=1 // pred_fallthru
      _
    // Predicated region
    $region30: #{net_forward.1} parent=1 // pred_check
      _
    $region31: #{net_forward.1} parent=1 // pred_check_branch
      %58 = sbr.rel (0) target = $region33
    $region32: #{net_forward.1} parent=1 // pred_region
      %59 = dma.done [#allocation6], 896
    $region33: #{net_forward.1} parent=1 // pred_fallthru
      _
    %v60 = vld [vmem:[#allocation2] sm:$0x3]
    %v61 = vld [vmem:[#allocation5] sm:$0xff]
    %v62 = vld [vmem:[#allocation5 + $0x8] sm:$0xff]
    %v63 = vld [vmem:[#allocation5 + $0x10] sm:$0xff]
    %v64 = vld [vmem:[#allocation5 + $0x18] sm:$0x3]
    %v65 = vld [vmem:[%s2] sm:$0x1]
    %v67 = vlaneseq
    %v68 = vshrl.u32 %v67, 7
    %v69 = vsub.s32 0, %v68
    %v70 = vrot.slane %v65, %v69
    %vm72 = vcmask 211968
    %v74 = vsel %vm72, %v60, 0
    %vm76 = vcmask 1041408
    %v78 = vsel %vm76, %v64, 0
    %80 = vmatprep.subr.mxu0 0.0
    %81 = vmatpush1.msra.mxu0 %v61
    %82 = vmatprep.subr.mxu0 0.0
    %83 = vmatpush1.msra.mxu0 %v62
    %84 = vmatprep.subr.mxu0 0.0
    %85 = vmatpush1.msra.mxu0 %v63
    %86 = vmatprep.subr.mxu0 0.0
    %87 = vmatpush1.msra.mxu0 %v78
    %88 = vmatprep.subr.mxu0 0.0
    %89 = vmatpush1.msra.mxu0 0.0
    %90 = vmatprep.subr.mxu0 0.0
    %91 = vmatpush1.msra.mxu0 0.0
    %92 = vmatprep.subr.mxu0 0.0
    %93 = vmatpush1.msra.mxu0 0.0
    %94 = vmatprep.subr.mxu0 0.0
    %95 = vmatpush1.msra.mxu0 0.0
    %96 = vmatprep.subr.mxu0 0.0
    %97 = vmatpush1.msra.mxu0 0.0
    %98 = vmatprep.subr.mxu0 0.0
    %99 = vmatpush1.msra.mxu0 0.0
    %100 = vmatprep.subr.mxu0 0.0
    %101 = vmatpush1.msra.mxu0 0.0
    %102 = vmatprep.subr.mxu0 0.0
    %103 = vmatpush1.msra.mxu0 0.0
    %104 = vmatprep.subr.mxu0 0.0
    %105 = vmatpush1.msra.mxu0 0.0
    %106 = vmatprep.subr.mxu0 0.0
    %107 = vmatpush1.msra.mxu0 0.0
    %108 = vmatprep.subr.mxu0 0.0
    %109 = vmatpush1.msra.mxu0 0.0
    %110 = vmatprep.subr.mxu0 0.0
    %111 = vmatpush1.msra.mxu0 0.0
    %112 = vmatprep.subr.mxu0 0.0
    %113 = vmatpush1.msra.mxu0 0.0
    %114 = vmatprep.subr.mxu0 0.0
    %115 = vmatpush1.msra.mxu0 0.0
    %116 = vmatprep.subr.mxu0 0.0
    %117 = vmatpush1.msra.mxu0 0.0
    %118 = vmatprep.subr.mxu0 0.0
    %119 = vmatpush1.msra.mxu0 0.0
    %120 = vmatprep.subr.mxu0 0.0
    %121 = vmatpush1.msra.mxu0 0.0
    %122 = vmatprep.subr.mxu0 0.0
    %123 = vmatpush1.msra.mxu0 0.0
    %124 = vmatprep.subr.mxu0 0.0
    %125 = vmatpush1.msra.mxu0 0.0
    %126 = vmatprep.subr.mxu0 0.0
    %127 = vmatpush1.msra.mxu0 0.0
    %128 = vmatprep.subr.mxu0 0.0
    %129 = vmatpush1.msra.mxu0 0.0
    %130 = vmatprep.subr.mxu0 0.0
    %131 = vmatpush1.msra.mxu0 0.0
    %132 = vmatprep.subr.mxu0 0.0
    %133 = vmatpush1.msra.mxu0 0.0
    %134 = vmatprep.subr.mxu0 0.0
    %135 = vmatpush1.msra.mxu0 0.0
    %136 = vmatprep.subr.mxu0 0.0
    %137 = vmatpush1.msra.mxu0 0.0
    %138 = vmatprep.subr.mxu0 0.0
    %139 = vmatpush1.msra.mxu0 0.0
    %140 = vmatprep.subr.mxu0 0.0
    %141 = vmatpush1.msra.mxu0 0.0
    %142 = vmatprep.subr.mxu0 0.0
    %143 = vmatpush1.msra.mxu0 0.0
    %144 = vmatprep.mubr.f32.mxu0 0.0
    %145 = vmatmul.mubr.f32.gmra.mrb[0].mxu0 %v74
    %v146 = vpop.f32.mrb[0].mxu0
    %v147 = vadd.f32 %v70, %v146
    %v148 = vpop.f32.mrb[0].mxu0
    %149 = vdwg.mxu0
    %v150 = vmax.f32 %v147, 0.0
    %v151 = vld [vmem:[#allocation7] sm:$0xff]
    %v152 = vld [vmem:[#allocation7 + $0x8] sm:$0xff]
    %v153 = vld [vmem:[#allocation7 + $0x10] sm:$0xff]
    %v154 = vld [vmem:[#allocation7 + $0x18] sm:$0xff]
    %v155 = vld [vmem:[#allocation7 + $0x20] sm:$0xff]
    %v156 = vld [vmem:[#allocation7 + $0x28] sm:$0xff]
    %v157 = vld [vmem:[#allocation7 + $0x30] sm:$0x3]
    %v158 = vld [vmem:[%s4] sm:$0x1]
    %v160 = vlaneseq
    %v161 = vshrl.u32 %v160, 7
    %v162 = vsub.s32 0, %v161
    %v163 = vrot.slane %v158, %v162
    %vm165 = vcmask 408576
    %v167 = vsel %vm165, %v150, 0
    %v170 = vsel %vm76, %v157, 0
    %172 = vmatprep.subr.mxu0 0.0
    %173 = vmatpush1.msra.mxu0 %v151
    %174 = vmatprep.subr.mxu0 0.0
    %175 = vmatpush1.msra.mxu0 %v152
    %176 = vmatprep.subr.mxu0 0.0
    %177 = vmatpush1.msra.mxu0 %v153
    %178 = vmatprep.subr.mxu0 0.0
    %179 = vmatpush1.msra.mxu0 %v154
    %180 = vmatprep.subr.mxu0 0.0
    %181 = vmatpush1.msra.mxu0 %v155
    %182 = vmatprep.subr.mxu0 0.0
    %183 = vmatpush1.msra.mxu0 %v156
    %184 = vmatprep.subr.mxu0 0.0
    %185 = vmatpush1.msra.mxu0 %v170
    %186 = vmatprep.subr.mxu0 0.0
    %187 = vmatpush1.msra.mxu0 0.0
    %188 = vmatprep.subr.mxu0 0.0
    %189 = vmatpush1.msra.mxu0 0.0
    %190 = vmatprep.subr.mxu0 0.0
    %191 = vmatpush1.msra.mxu0 0.0
    %192 = vmatprep.subr.mxu0 0.0
    %193 = vmatpush1.msra.mxu0 0.0
    %194 = vmatprep.subr.mxu0 0.0
    %195 = vmatpush1.msra.mxu0 0.0
    %196 = vmatprep.subr.mxu0 0.0
    %197 = vmatpush1.msra.mxu0 0.0
    %198 = vmatprep.subr.mxu0 0.0
    %199 = vmatpush1.msra.mxu0 0.0
    %200 = vmatprep.subr.mxu0 0.0
    %201 = vmatpush1.msra.mxu0 0.0
    %202 = vmatprep.subr.mxu0 0.0
    %203 = vmatpush1.msra.mxu0 0.0
    %204 = vmatprep.subr.mxu0 0.0
    %205 = vmatpush1.msra.mxu0 0.0
    %206 = vmatprep.subr.mxu0 0.0
    %207 = vmatpush1.msra.mxu0 0.0
    %208 = vmatprep.subr.mxu0 0.0
    %209 = vmatpush1.msra.mxu0 0.0
    %210 = vmatprep.subr.mxu0 0.0
    %211 = vmatpush1.msra.mxu0 0.0
    %212 = vmatprep.subr.mxu0 0.0
    %213 = vmatpush1.msra.mxu0 0.0
    %214 = vmatprep.subr.mxu0 0.0
    %215 = vmatpush1.msra.mxu0 0.0
    %216 = vmatprep.subr.mxu0 0.0
    %217 = vmatpush1.msra.mxu0 0.0
    %218 = vmatprep.subr.mxu0 0.0
    %219 = vmatpush1.msra.mxu0 0.0
    %220 = vmatprep.subr.mxu0 0.0
    %221 = vmatpush1.msra.mxu0 0.0
    %222 = vmatprep.subr.mxu0 0.0
    %223 = vmatpush1.msra.mxu0 0.0
    %224 = vmatprep.subr.mxu0 0.0
    %225 = vmatpush1.msra.mxu0 0.0
    %226 = vmatprep.subr.mxu0 0.0
    %227 = vmatpush1.msra.mxu0 0.0
    %228 = vmatprep.subr.mxu0 0.0
    %229 = vmatpush1.msra.mxu0 0.0
    %230 = vmatprep.subr.mxu0 0.0
    %231 = vmatpush1.msra.mxu0 0.0
    %232 = vmatprep.subr.mxu0 0.0
    %233 = vmatpush1.msra.mxu0 0.0
    %234 = vmatprep.subr.mxu0 0.0
    %235 = vmatpush1.msra.mxu0 0.0
    %236 = vmatprep.mubr.f32.mxu0 0.0
    %237 = vmatmul.mubr.f32.gmra.mrb[0].mxu0 %v167
    %v238 = vpop.f32.mrb[0].mxu0
    %v239 = vadd.f32 %v163, %v238
    %v240 = vpop.f32.mrb[0].mxu0
    %241 = vdwg.mxu0
    %vm242 = vcmask 656384
    %243 = vst.msk [vmem:[#allocation8] sm:$0x3] %vm242, %v239
    // Predicated region
    $region34: #{net_forward.1} parent=1 // pred_check
      _
    $region35: #{net_forward.1} parent=1 // pred_check_branch
      %245 = sbr.rel (0) target = $region37
    $region36: #{net_forward.1} parent=1 // pred_region
      %s247 = ssub.s32 32, 32
      %248 = vsyncadd [#allocation4], %s247
      %s250 = sshll.u32 [#allocation8], 4
      %s251 = int_to_ptr.vmem [resolvable:$true] %s250
      %253 = dma.vmem_to_hbm [thread:$0]  %s251, 32, %s5, [#allocation4]
    $region37: #{net_forward.1} parent=1 // pred_fallthru
      _
    // Predicated region
    $region38: #{net_forward.1} parent=1 // pred_check
      _
    $region39: #{net_forward.1} parent=1 // pred_check_branch
      %255 = sbr.rel (0) target = $region41
    $region40: #{net_forward.1} parent=1 // pred_region
      %256 = dma.done [#allocation4], 32
    $region41: #{net_forward.1} parent=1 // pred_fallthru
      _
    %257 = vsyncpa [#allocation3], 1
    %258 = vsyncpa [#allocation6], 1
    %259 = vsyncpa [#allocation4], 1

</llo_original>
